<compile_context>
chip_gen: v7x
topology: tpu7x:2x2x1
jax: 0.10.0
libtpu: 0.0.40
codegen_flags: <defaults>
</compile_context>

<pallas_src>
from functools import partial

import jax
import jax.numpy as jnp
from jax.experimental import pallas as pl
from jax.experimental.pallas import tpu as pltpu


def _round_up(n, m):
    return ((n + m - 1) // m) * m


def _fused_linear_ce_kernel(x_ref, w_ref, b_ref, tgt_ref, fc_ref, loss_ref, *,
                            num_classes):
    # x_ref:    (TILE_B, D)      bf16   (flattened input tile)
    # w_ref:    (D, C_PAD)       bf16   (transposed Linear weight, resident)
    # b_ref:    (1, C_PAD)       f32    (bias, padded lanes = 0)
    # tgt_ref:  (TILE_B, 1)      i32    (class indices; -1 marks padded rows)
    # fc_ref:   (TILE_B, C_PAD)  f32    (logits tile, lane-dense store)
    # loss_ref: (1, C_PAD)       f32    (per-tile loss partial, broadcast on lanes)
    logits = jnp.dot(x_ref[...], w_ref[...],
                     preferred_element_type=jnp.float32) + b_ref[...]
    fc_ref[...] = logits

    tile_b, c_pad = logits.shape
    class_ids = jax.lax.broadcasted_iota(jnp.int32, (tile_b, c_pad), 1)
    valid_class = class_ids < num_classes

    # Numerically stable log-sum-exp over the real classes only.
    masked = jnp.where(valid_class, logits, jnp.float32(-1e30))
    m = jnp.max(masked, axis=-1, keepdims=True)
    lse = m + jnp.log(jnp.sum(jnp.exp(masked - m), axis=-1, keepdims=True))

    tgt = tgt_ref[...]                                     # (TILE_B, 1)
    tgt_logit = jnp.sum(jnp.where(class_ids == tgt, logits, 0.0),
                        axis=-1, keepdims=True)

    valid_row = tgt >= 0                                   # padded rows -> False
    per_example = jnp.where(valid_row, lse - tgt_logit, 0.0)
    loss_ref[...] = jnp.broadcast_to(jnp.sum(per_example), loss_ref.shape)


def example_model_with_loss(x_nchw, weight_t, bias, target=None, *, tile_b=None):
    """x_nchw: (B, C, H, W) f32; weight_t: (D, num_classes); bias: (num_classes,);
    target: (B,) int32 or None.  Returns (fc, loss) or fc if target is None."""
    bsz = x_nchw.shape[0]
    d, num_classes = weight_t.shape
    c_pad = _round_up(num_classes, 128)

    if tile_b is None:
        tile_b = min(256, _round_up(bsz, 8))
    tile_b = _round_up(tile_b, 8)
    b_pad = _round_up(bsz, tile_b)
    num_tiles = b_pad // tile_b

    # --- glue: flatten / pad / dtype prep ------------------------------------
    x_flat = x_nchw.reshape(bsz, d).astype(jnp.bfloat16)
    x_p = jnp.zeros((b_pad, d), jnp.bfloat16).at[:bsz].set(x_flat)
    w_p = jnp.zeros((d, c_pad), jnp.bfloat16).at[:, :num_classes].set(
        weight_t.astype(jnp.bfloat16))
    bias_p = jnp.zeros((1, c_pad), jnp.float32).at[0, :num_classes].set(
        bias.astype(jnp.float32))
    if target is None:
        tgt = jnp.zeros((bsz,), jnp.int32)
    else:
        tgt = target.astype(jnp.int32)
    tgt_p = jnp.full((b_pad, 1), -1, jnp.int32).at[:bsz, 0].set(tgt)

    kernel = partial(_fused_linear_ce_kernel, num_classes=num_classes)

    cost = pl.CostEstimate(
        flops=2 * b_pad * d * c_pad,
        transcendentals=b_pad * c_pad,
        bytes_accessed=(x_p.size * 2 + w_p.size * 2 + bias_p.size * 4
                        + tgt_p.size * 4 + b_pad * c_pad * 4
                        + num_tiles * c_pad * 4),
    )

    fc_pad, loss_parts = pl.pallas_call(
        kernel,
        out_shape=(
            jax.ShapeDtypeStruct((b_pad, c_pad), jnp.float32),
            jax.ShapeDtypeStruct((num_tiles, c_pad), jnp.float32),
        ),
        grid_spec=pltpu.PrefetchScalarGridSpec(
            num_scalar_prefetch=0,
            grid=(num_tiles,),
            in_specs=[
                pl.BlockSpec((tile_b, d), lambda i: (i, 0)),   # x tile (streamed)
                pl.BlockSpec((d, c_pad), lambda i: (0, 0)),    # W resident
                pl.BlockSpec((1, c_pad), lambda i: (0, 0)),    # bias resident
                pl.BlockSpec((tile_b, 1), lambda i: (i, 0)),   # targets tile
            ],
            out_specs=(
                pl.BlockSpec((tile_b, c_pad), lambda i: (i, 0)),   # fc tile
                pl.BlockSpec((1, c_pad), lambda i: (i, 0)),        # loss partial
            ),
        ),
        compiler_params=pltpu.CompilerParams(
            dimension_semantics=("parallel",),
        ),
        cost_estimate=cost,
    )(x_p, w_p, bias_p, tgt_p)

    fc = fc_pad[:bsz, :num_classes]
    if target is None:
        return fc
    loss = jnp.sum(loss_parts[:, 0]) / bsz
    return fc, loss


if __name__ == "__main__":
    # Small shapes consistent with the module: data_shape=(4, 16, 16), 10 classes.
    batch = 2
    data_shape = (4, 16, 16)
    num_classes = 10
    d = data_shape[0] * data_shape[1] * data_shape[2]

    key = jax.random.PRNGKey(0)
    kx, kw, kb, kt = jax.random.split(key, 4)

    x = jax.random.normal(kx, (batch,) + data_shape, dtype=jnp.float32)
    # Deterministic Linear params (roughly PyTorch's uniform(-1/sqrt(D), 1/sqrt(D))).
    bound = 1.0 / (d ** 0.5)
    weight_t = jax.random.uniform(kw, (d, num_classes), jnp.float32, -bound, bound)
    bias = jax.random.uniform(kb, (num_classes,), jnp.float32, -bound, bound)
    target = jax.random.randint(kt, (batch,), 0, num_classes, dtype=jnp.int32)

    fc, loss = example_model_with_loss(x, weight_t, bias, target)
    jax.block_until_ready((fc, loss))

    # Pure-JAX f32 reference.  Kernel uses bf16 operands with f32 accumulation,
    # so tolerances are loosened accordingly.
    x_flat = x.reshape(batch, d)
    logits_ref = x_flat @ weight_t + bias
    lse = jax.scipy.special.logsumexp(logits_ref, axis=-1)
    loss_ref = jnp.mean(lse - logits_ref[jnp.arange(batch), target])
    assert fc.shape == (batch, num_classes)
    assert jnp.allclose(fc, logits_ref, atol=2e-2, rtol=2e-2)
    assert jnp.allclose(loss, loss_ref, atol=2e-2, rtol=2e-2)

    print("KERNEL_OK")
</pallas_src>

<mosaic_0001>
module attributes {stable_mosaic.version = 11 : i64} {
  func.func @_fused_linear_ce_kernel(%arg0: i32, %arg1: memref<8x1024xbf16, #tpu.memory_space<vmem>>, %arg2: memref<1024x128xbf16, #tpu.memory_space<vmem>>, %arg3: memref<1x128xf32, #tpu.memory_space<vmem>>, %arg4: memref<8x1xi32, #tpu.memory_space<vmem>>, %arg5: memref<8x128xf32, #tpu.memory_space<vmem>>, %arg6: memref<1x128xf32, #tpu.memory_space<vmem>>) attributes {dimension_semantics = [#tpu.dimension_semantics<parallel>], iteration_bounds = array<i64: 1>, scalar_prefetch = 0 : i64, scratch_operands = 0 : i64, tpu.core_type = #tpu.core_type<tc>, window_params = [{transform_indices = @transform_0, window_bounds = array<i64: 8, 1024>}, {pipeline_mode = #tpu.pipeline_mode<synchronous>, transform_indices = @transform_1, window_bounds = array<i64: 1024, 128>}, {pipeline_mode = #tpu.pipeline_mode<synchronous>, transform_indices = @transform_2, window_bounds = array<i64: 1, 128>}, {transform_indices = @transform_3, window_bounds = array<i64: 8, 1>}, {transform_indices = @transform_4, window_bounds = array<i64: 8, 128>}, {transform_indices = @transform_5, window_bounds = array<i64: 1, 128>}]} {
    %c0 = arith.constant 0 : index
    %c0_0 = arith.constant 0 : index
    %0 = vector.load %arg1[%c0, %c0_0] : memref<8x1024xbf16, #tpu.memory_space<vmem>>, vector<8x1024xbf16>
    %c0_1 = arith.constant 0 : index
    %c0_2 = arith.constant 0 : index
    %1 = vector.load %arg2[%c0_1, %c0_2] : memref<1024x128xbf16, #tpu.memory_space<vmem>>, vector<1024x128xbf16>
    %cst = arith.constant dense<0.000000e+00> : vector<8x128xf32>
    %2 = tpu.matmul %0, %1, %cst {dimension_numbers = #tpu.dot_dimension_numbers<[1], [0], [0], [1], [0, 0, 1, 1], [], []>} : vector<8x1024xbf16>, vector<1024x128xbf16>, vector<8x128xf32> -> vector<8x128xf32>
    %c0_3 = arith.constant 0 : index
    %c0_4 = arith.constant 0 : index
    %3 = vector.load %arg3[%c0_3, %c0_4] : memref<1x128xf32, #tpu.memory_space<vmem>>, vector<1x128xf32>
    %4 = vector.broadcast %3 : vector<1x128xf32> to vector<8x128xf32>
    %5 = arith.addf %2, %4 : vector<8x128xf32>
    %c0_5 = arith.constant 0 : index
    %c0_6 = arith.constant 0 : index
    %6 = vector.load %arg5[%c0_5, %c0_6] : memref<8x128xf32, #tpu.memory_space<vmem>>, vector<8x128xf32>
    tpu.vector_store %arg5[%c0_5, %c0_6], %5 {strides = array<i32>} : memref<8x128xf32, #tpu.memory_space<vmem>>, vector<8x128xf32>,
    %7 = tpu.iota {dimensions = array<i32: 1>} : vector<8x128xi32>
    %c10_i32 = arith.constant 10 : i32
    %8 = vector.broadcast %c10_i32 : i32 to vector<8x128xi32>
    %9 = arith.cmpi slt, %7, %8 : vector<8x128xi32>
    %cst_7 = arith.constant -1.000000e+30 : f32
    %10 = vector.broadcast %cst_7 : f32 to vector<8x128xf32>
    %11 = arith.select %9, %5, %10 : vector<8x128xi1>, vector<8x128xf32>
    %cst_8 = arith.constant dense<0xFF800000> : vector<8xf32>
    %12 = vector.multi_reduction <maximumf>, %11, %cst_8 [1] : vector<8x128xf32> to vector<8xf32>
    %13 = vector.shape_cast %12 : vector<8xf32> to vector<8x1xf32>
    %14 = vector.broadcast %13 : vector<8x1xf32> to vector<8x128xf32>
    %15 = arith.subf %11, %14 : vector<8x128xf32>
    %16 = math.exp %15 : vector<8x128xf32>
    %cst_9 = arith.constant dense<0.000000e+00> : vector<8xf32>
    %17 = vector.multi_reduction <add>, %16, %cst_9 [1] : vector<8x128xf32> to vector<8xf32>
    %18 = vector.shape_cast %17 : vector<8xf32> to vector<8x1xf32>
    %19 = math.log %18 : vector<8x1xf32>
    %20 = arith.addf %13, %19 : vector<8x1xf32>
    %c0_10 = arith.constant 0 : index
    %c0_11 = arith.constant 0 : index
    %21 = vector.load %arg4[%c0_10, %c0_11] : memref<8x1xi32, #tpu.memory_space<vmem>>, vector<8x1xi32>
    %22 = vector.broadcast %21 : vector<8x1xi32> to vector<8x128xi32>
    %23 = arith.cmpi eq, %7, %22 : vector<8x128xi32>
    %cst_12 = arith.constant 0.000000e+00 : f32
    %24 = vector.broadcast %cst_12 : f32 to vector<8x128xf32>
    %25 = arith.select %23, %5, %24 : vector<8x128xi1>, vector<8x128xf32>
    %cst_13 = arith.constant dense<0.000000e+00> : vector<8xf32>
    %26 = vector.multi_reduction <add>, %25, %cst_13 [1] : vector<8x128xf32> to vector<8xf32>
    %27 = vector.shape_cast %26 : vector<8xf32> to vector<8x1xf32>
    %c0_i32 = arith.constant 0 : i32
    %28 = vector.broadcast %c0_i32 : i32 to vector<8x1xi32>
    %29 = arith.cmpi sge, %21, %28 : vector<8x1xi32>
    %30 = arith.subf %20, %27 : vector<8x1xf32>
    %cst_14 = arith.constant 0.000000e+00 : f32
    %31 = vector.broadcast %cst_14 : f32 to vector<8x1xf32>
    %32 = arith.select %29, %30, %31 : vector<8x1xi1>, vector<8x1xf32>
    %33 = vector.shape_cast %32 : vector<8x1xf32> to vector<1x8x1xf32>
    %cst_15 = arith.constant dense<0.000000e+00> : vector<1xf32>
    %34 = vector.multi_reduction <add>, %33, %cst_15 [1, 2] : vector<1x8x1xf32> to vector<1xf32>
    %35 = vector.shape_cast %34 : vector<1xf32> to vector<1x1x1xf32>
    %36 = vector.extract %35[0, 0, 0] : f32 from vector<1x1x1xf32>
    %37 = vector.broadcast %36 : f32 to vector<1x128xf32>
    %c0_16 = arith.constant 0 : index
    %c0_17 = arith.constant 0 : index
    %38 = vector.load %arg6[%c0_16, %c0_17] : memref<1x128xf32, #tpu.memory_space<vmem>>, vector<1x128xf32>
    tpu.vector_store %arg6[%c0_16, %c0_17], %37 {strides = array<i32>} : memref<1x128xf32, #tpu.memory_space<vmem>>, vector<1x128xf32>,
    return
  }
  func.func @transform_0(%arg0: i32) -> (i32, i32) {
    %c0_i32 = arith.constant 0 : i32
    %c0_i32_0 = arith.constant 0 : i32
    return %arg0, %c0_i32 : i32, i32
  }
  func.func @transform_1(%arg0: i32) -> (i32, i32) {
    %c0_i32 = arith.constant 0 : i32
    %c0_i32_0 = arith.constant 0 : i32
    %c0_i32_1 = arith.constant 0 : i32
    return %c0_i32, %c0_i32_0 : i32, i32
  }
  func.func @transform_2(%arg0: i32) -> (i32, i32) {
    %c0_i32 = arith.constant 0 : i32
    %c0_i32_0 = arith.constant 0 : i32
    %c0_i32_1 = arith.constant 0 : i32
    return %c0_i32, %c0_i32_0 : i32, i32
  }
  func.func @transform_3(%arg0: i32) -> (i32, i32) {
    %c0_i32 = arith.constant 0 : i32
    %c0_i32_0 = arith.constant 0 : i32
    return %arg0, %c0_i32 : i32, i32
  }
  func.func @transform_4(%arg0: i32) -> (i32, i32) {
    %c0_i32 = arith.constant 0 : i32
    %c0_i32_0 = arith.constant 0 : i32
    return %arg0, %c0_i32 : i32, i32
  }
  func.func @transform_5(%arg0: i32) -> (i32, i32) {
    %c0_i32 = arith.constant 0 : i32
    %c0_i32_0 = arith.constant 0 : i32
    return %arg0, %c0_i32 : i32, i32
  }
}

</mosaic_0001>

<llo_original>
// kernel: tpu_custom_call.1
$region0: #{tpu_custom_call.1}
  #allocation0 [shape = 'u32[]', space=smem, size = 0x4, offset = 0x4, fixed_abs, tag = 'smem constant byte address 0x4 - core index']
  #allocation1 [shape = 'u32[144,128]{1,0:T(1,128)}', space=vmem, size = 0x12000, scoped, tag = 'internal scratch']
  %s0 = inlined_call_operand.hbm [shape: bf16[8,1024], index: 0, kind: input, shape index: {}]
  %s1 = inlined_call_operand.hbm [shape: bf16[1024,128], index: 1, kind: input, shape index: {}]
  %s2 = inlined_call_operand.vmem [shape: f32[1,128], index: 2, kind: input, shape index: {}]
  %s3 = inlined_call_operand.vmem [shape: s32[8,1], index: 3, kind: input, shape index: {}]
  %s4 = inlined_call_operand.hbm [shape: f32[8,128], index: 4, kind: output, shape index: {0}]
  %s5 = inlined_call_operand.hbm [shape: f32[1,128], index: 5, kind: output, shape index: {1}]
  %6 = xla_tuple %s4, %s5
  %s7 = sld [smem:[#allocation0]]
  $region42: #{tpu_custom_call.1} parent=0
    _
  %s9 = ssub.s32 1, %s7
  %s10 = scalar_select 0, %s9, %s7
  $region1: #{tpu_custom_call.1} parent=0
    #allocation2 [shape = 'u8[16384]{0}', space=vmem, size = 0x4000, scoped, tag = 'input window, operand 0, single buffered']
    #allocation3 [shape = 's32[1]{0}', space=sflag, size = 0x4, scoped, tag = 'scoped memory for tpu_custom_call.1']
    #allocation4 [shape = 's32[1]{0}', space=sflag, size = 0x4, scoped, tag = 'scoped memory for tpu_custom_call.1']
    #allocation5 [shape = 'u8[262144]{0}', space=vmem, size = 0x40000, scoped, tag = 'input window, operand 1, single buffered']
    #allocation6 [shape = 's32[1]{0}', space=sflag, size = 0x4, scoped, tag = 'scoped memory for tpu_custom_call.1']
    #allocation7 [shape = 'u8[4096]{0}', space=vmem, size = 0x1000, scoped, tag = 'output window, operand 0, single buffered']
    #allocation8 [shape = 'u8[512]{0}', space=vmem, size = 0x400, scoped, tag = 'output window, operand 1, single buffered']
    #allocation9 [shape = 's32[1]{0}', space=sflag, size = 0x4, scoped, tag = 'scoped memory for tpu_custom_call.1']
    %11 = vsyncpa [#allocation3], 0
    %12 = vsyncpa [#allocation6], 0
    %13 = vsyncpa [#allocation4], 0
    %14 = vsyncpa [#allocation9], 0
    // Predicated region
    $region2: #{tpu_custom_call.1} parent=1 // pred_check
      _
    $region3: #{tpu_custom_call.1} parent=1 // pred_check_branch
      %16 = sbr.rel (0) target = $region5
    $region4: #{tpu_custom_call.1} parent=1 // pred_region
      %s18 = ssub.s32 512, 512
      %19 = vsyncadd [#allocation3], %s18
      %s21 = sshll.u32 [#allocation2], 4
      %s22 = int_to_ptr.vmem [resolvable:$true] %s21
      %24 = dma.hbm_to_vmem [thread:$0]  %s0, 512, %s22, [#allocation3]
    $region5: #{tpu_custom_call.1} parent=1 // pred_fallthru
      _
    // Predicated region
    $region6: #{tpu_custom_call.1} parent=1 // pred_check
      _
    $region7: #{tpu_custom_call.1} parent=1 // pred_check_branch
      %26 = sbr.rel (0) target = $region9
    $region8: #{tpu_custom_call.1} parent=1 // pred_region
      %s28 = ssub.s32 8192, 8192
      %29 = vsyncadd [#allocation6], %s28
      %s30 = sshll.u32 [#allocation5], 4
      %s31 = int_to_ptr.vmem [resolvable:$true] %s30
      %36 = dma.hbm_to_vmem [thread:$0]  %s1, 8192, %s31, [#allocation6], 64, 64, 4
    $region9: #{tpu_custom_call.1} parent=1 // pred_fallthru
      _
    // Predicated region
    $region10: #{tpu_custom_call.1} parent=1 // pred_check
      _
    $region11: #{tpu_custom_call.1} parent=1 // pred_check_branch
      %38 = sbr.rel (0) target = $region13
    $region12: #{tpu_custom_call.1} parent=1 // pred_region
      _
    $region13: #{tpu_custom_call.1} parent=1 // pred_fallthru
      _
    // Predicated region
    $region14: #{tpu_custom_call.1} parent=1 // pred_check
      _
    $region15: #{tpu_custom_call.1} parent=1 // pred_check_branch
      %40 = sbr.rel (0) target = $region17
    $region16: #{tpu_custom_call.1} parent=1 // pred_region
      _
    $region17: #{tpu_custom_call.1} parent=1 // pred_fallthru
      _
    // Predicated region
    $region18: #{tpu_custom_call.1} parent=1 // pred_check
      _
    $region19: #{tpu_custom_call.1} parent=1 // pred_check_branch
      %42 = sbr.rel (0) target = $region21
    $region20: #{tpu_custom_call.1} parent=1 // pred_region
      %43 = dma.done [#allocation3], 512
    $region21: #{tpu_custom_call.1} parent=1 // pred_fallthru
      _
    // Predicated region
    $region22: #{tpu_custom_call.1} parent=1 // pred_check
      _
    $region23: #{tpu_custom_call.1} parent=1 // pred_check_branch
      %45 = sbr.rel (0) target = $region25
    $region24: #{tpu_custom_call.1} parent=1 // pred_region
      %46 = dma.done [#allocation6], 8192
    $region25: #{tpu_custom_call.1} parent=1 // pred_fallthru
      _
    %v48 = vld [vmem:[#allocation2] sm:$0xff]
    %v49 = vld [vmem:[#allocation2 + $0x8] sm:$0xff]
    %v50 = vld [vmem:[#allocation2 + $0x10] sm:$0xff]
    %v51 = vld [vmem:[#allocation2 + $0x18] sm:$0xff]
    %v52 = vld [vmem:[#allocation5] sm:$0xf]
    %v53 = vld [vmem:[#allocation5 + $0x4] sm:$0xf]
    %v54 = vld [vmem:[#allocation5 + $0x8] sm:$0xf]
    %v55 = vld [vmem:[#allocation5 + $0xc] sm:$0xf]
    %v56 = vld [vmem:[#allocation5 + $0x10] sm:$0xf]
    %v57 = vld [vmem:[#allocation5 + $0x14] sm:$0xf]
    %v58 = vld [vmem:[#allocation5 + $0x18] sm:$0xf]
    %v59 = vld [vmem:[#allocation5 + $0x1c] sm:$0xf]
    %v60 = vld [vmem:[#allocation5 + $0x20] sm:$0xf]
    %v61 = vld [vmem:[#allocation5 + $0x24] sm:$0xf]
    %v62 = vld [vmem:[#allocation5 + $0x28] sm:$0xf]
    %v63 = vld [vmem:[#allocation5 + $0x2c] sm:$0xf]
    %v64 = vld [vmem:[#allocation5 + $0x30] sm:$0xf]
    %v65 = vld [vmem:[#allocation5 + $0x34] sm:$0xf]
    %v66 = vld [vmem:[#allocation5 + $0x38] sm:$0xf]
    %v67 = vld [vmem:[#allocation5 + $0x3c] sm:$0xf]
    %v68 = vld [vmem:[#allocation5 + $0x40] sm:$0xf]
    %v69 = vld [vmem:[#allocation5 + $0x44] sm:$0xf]
    %v70 = vld [vmem:[#allocation5 + $0x48] sm:$0xf]
    %v71 = vld [vmem:[#allocation5 + $0x4c] sm:$0xf]
    %v72 = vld [vmem:[#allocation5 + $0x50] sm:$0xf]
    %v73 = vld [vmem:[#allocation5 + $0x54] sm:$0xf]
    %v74 = vld [vmem:[#allocation5 + $0x58] sm:$0xf]
    %v75 = vld [vmem:[#allocation5 + $0x5c] sm:$0xf]
    %v76 = vld [vmem:[#allocation5 + $0x60] sm:$0xf]
    %v77 = vld [vmem:[#allocation5 + $0x64] sm:$0xf]
    %v78 = vld [vmem:[#allocation5 + $0x68] sm:$0xf]
    %v79 = vld [vmem:[#allocation5 + $0x6c] sm:$0xf]
    %v80 = vld [vmem:[#allocation5 + $0x70] sm:$0xf]
    %v81 = vld [vmem:[#allocation5 + $0x74] sm:$0xf]
    %v82 = vld [vmem:[#allocation5 + $0x78] sm:$0xf]
    %v83 = vld [vmem:[#allocation5 + $0x7c] sm:$0xf]
    %v84 = vld [vmem:[#allocation5 + $0x80] sm:$0xf]
    %v85 = vld [vmem:[#allocation5 + $0x84] sm:$0xf]
    %v86 = vld [vmem:[#allocation5 + $0x88] sm:$0xf]
    %v87 = vld [vmem:[#allocation5 + $0x8c] sm:$0xf]
    %v88 = vld [vmem:[#allocation5 + $0x90] sm:$0xf]
    %v89 = vld [vmem:[#allocation5 + $0x94] sm:$0xf]
    %v90 = vld [vmem:[#allocation5 + $0x98] sm:$0xf]
    %v91 = vld [vmem:[#allocation5 + $0x9c] sm:$0xf]
    %v92 = vld [vmem:[#allocation5 + $0xa0] sm:$0xf]
    %v93 = vld [vmem:[#allocation5 + $0xa4] sm:$0xf]
    %v94 = vld [vmem:[#allocation5 + $0xa8] sm:$0xf]
    %v95 = vld [vmem:[#allocation5 + $0xac] sm:$0xf]
    %v96 = vld [vmem:[#allocation5 + $0xb0] sm:$0xf]
    %v97 = vld [vmem:[#allocation5 + $0xb4] sm:$0xf]
    %v98 = vld [vmem:[#allocation5 + $0xb8] sm:$0xf]
    %v99 = vld [vmem:[#allocation5 + $0xbc] sm:$0xf]
    %v100 = vld [vmem:[#allocation5 + $0xc0] sm:$0xf]
    %v101 = vld [vmem:[#allocation5 + $0xc4] sm:$0xf]
    %v102 = vld [vmem:[#allocation5 + $0xc8] sm:$0xf]
    %v103 = vld [vmem:[#allocation5 + $0xcc] sm:$0xf]
    %v104 = vld [vmem:[#allocation5 + $0xd0] sm:$0xf]
    %v105 = vld [vmem:[#allocation5 + $0xd4] sm:$0xf]
    %v106 = vld [vmem:[#allocation5 + $0xd8] sm:$0xf]
    %v107 = vld [vmem:[#allocation5 + $0xdc] sm:$0xf]
    %v108 = vld [vmem:[#allocation5 + $0xe0] sm:$0xf]
    %v109 = vld [vmem:[#allocation5 + $0xe4] sm:$0xf]
    %v110 = vld [vmem:[#allocation5 + $0xe8] sm:$0xf]
    %v111 = vld [vmem:[#allocation5 + $0xec] sm:$0xf]
    %v112 = vld [vmem:[#allocation5 + $0xf0] sm:$0xf]
    %v113 = vld [vmem:[#allocation5 + $0xf4] sm:$0xf]
    %v114 = vld [vmem:[#allocation5 + $0xf8] sm:$0xf]
    %v115 = vld [vmem:[#allocation5 + $0xfc] sm:$0xf]
    %v116 = vld [vmem:[#allocation5 + $0x100] sm:$0xf]
    %v117 = vld [vmem:[#allocation5 + $0x104] sm:$0xf]
    %v118 = vld [vmem:[#allocation5 + $0x108] sm:$0xf]
    %v119 = vld [vmem:[#allocation5 + $0x10c] sm:$0xf]
    %v120 = vld [vmem:[#allocation5 + $0x110] sm:$0xf]
    %v121 = vld [vmem:[#allocation5 + $0x114] sm:$0xf]
    %v122 = vld [vmem:[#allocation5 + $0x118] sm:$0xf]
    %v123 = vld [vmem:[#allocation5 + $0x11c] sm:$0xf]
    %v124 = vld [vmem:[#allocation5 + $0x120] sm:$0xf]
    %v125 = vld [vmem:[#allocation5 + $0x124] sm:$0xf]
    %v126 = vld [vmem:[#allocation5 + $0x128] sm:$0xf]
    %v127 = vld [vmem:[#allocation5 + $0x12c] sm:$0xf]
    %v128 = vld [vmem:[#allocation5 + $0x130] sm:$0xf]
    %v129 = vld [vmem:[#allocation5 + $0x134] sm:$0xf]
    %v130 = vld [vmem:[#allocation5 + $0x138] sm:$0xf]
    %v131 = vld [vmem:[#allocation5 + $0x13c] sm:$0xf]
    %v132 = vld [vmem:[#allocation5 + $0x140] sm:$0xf]
    %v133 = vld [vmem:[#allocation5 + $0x144] sm:$0xf]
    %v134 = vld [vmem:[#allocation5 + $0x148] sm:$0xf]
    %v135 = vld [vmem:[#allocation5 + $0x14c] sm:$0xf]
    %v136 = vld [vmem:[#allocation5 + $0x150] sm:$0xf]
    %v137 = vld [vmem:[#allocation5 + $0x154] sm:$0xf]
    %v138 = vld [vmem:[#allocation5 + $0x158] sm:$0xf]
    %v139 = vld [vmem:[#allocation5 + $0x15c] sm:$0xf]
    %v140 = vld [vmem:[#allocation5 + $0x160] sm:$0xf]
    %v141 = vld [vmem:[#allocation5 + $0x164] sm:$0xf]
    %v142 = vld [vmem:[#allocation5 + $0x168] sm:$0xf]
    %v143 = vld [vmem:[#allocation5 + $0x16c] sm:$0xf]
    %v144 = vld [vmem:[#allocation5 + $0x170] sm:$0xf]
    %v145 = vld [vmem:[#allocation5 + $0x174] sm:$0xf]
    %v146 = vld [vmem:[#allocation5 + $0x178] sm:$0xf]
    %v147 = vld [vmem:[#allocation5 + $0x17c] sm:$0xf]
    %v148 = vld [vmem:[#allocation5 + $0x180] sm:$0xf]
    %v149 = vld [vmem:[#allocation5 + $0x184] sm:$0xf]
    %v150 = vld [vmem:[#allocation5 + $0x188] sm:$0xf]
    %v151 = vld [vmem:[#allocation5 + $0x18c] sm:$0xf]
    %v152 = vld [vmem:[#allocation5 + $0x190] sm:$0xf]
    %v153 = vld [vmem:[#allocation5 + $0x194] sm:$0xf]
    %v154 = vld [vmem:[#allocation5 + $0x198] sm:$0xf]
    %v155 = vld [vmem:[#allocation5 + $0x19c] sm:$0xf]
    %v156 = vld [vmem:[#allocation5 + $0x1a0] sm:$0xf]
    %v157 = vld [vmem:[#allocation5 + $0x1a4] sm:$0xf]
    %v158 = vld [vmem:[#allocation5 + $0x1a8] sm:$0xf]
    %v159 = vld [vmem:[#allocation5 + $0x1ac] sm:$0xf]
    %v160 = vld [vmem:[#allocation5 + $0x1b0] sm:$0xf]
    %v161 = vld [vmem:[#allocation5 + $0x1b4] sm:$0xf]
    %v162 = vld [vmem:[#allocation5 + $0x1b8] sm:$0xf]
    %v163 = vld [vmem:[#allocation5 + $0x1bc] sm:$0xf]
    %v164 = vld [vmem:[#allocation5 + $0x1c0] sm:$0xf]
    %v165 = vld [vmem:[#allocation5 + $0x1c4] sm:$0xf]
    %v166 = vld [vmem:[#allocation5 + $0x1c8] sm:$0xf]
    %v167 = vld [vmem:[#allocation5 + $0x1cc] sm:$0xf]
    %v168 = vld [vmem:[#allocation5 + $0x1d0] sm:$0xf]
    %v169 = vld [vmem:[#allocation5 + $0x1d4] sm:$0xf]
    %v170 = vld [vmem:[#allocation5 + $0x1d8] sm:$0xf]
    %v171 = vld [vmem:[#allocation5 + $0x1dc] sm:$0xf]
    %v172 = vld [vmem:[#allocation5 + $0x1e0] sm:$0xf]
    %v173 = vld [vmem:[#allocation5 + $0x1e4] sm:$0xf]
    %v174 = vld [vmem:[#allocation5 + $0x1e8] sm:$0xf]
    %v175 = vld [vmem:[#allocation5 + $0x1ec] sm:$0xf]
    %v176 = vld [vmem:[#allocation5 + $0x1f0] sm:$0xf]
    %v177 = vld [vmem:[#allocation5 + $0x1f4] sm:$0xf]
    %v178 = vld [vmem:[#allocation5 + $0x1f8] sm:$0xf]
    %v179 = vld [vmem:[#allocation5 + $0x1fc] sm:$0xf]
    %v180 = vld [vmem:[%s2] sm:$0x1]
    %v182 = vlaneseq
    %v183 = vshrl.u32 %v182, 7
    %v184 = vsub.s32 0, %v183
    %v185 = vrot.slane %v180, %v184
    %v191 = vunpack.c.l.b16 %v48
    %v192 = vunpack.c.h.b16 %v48
    %v193 = vunpack.c.l.b16 %v49
    %v194 = vunpack.c.h.b16 %v49
    %v195 = vunpack.c.l.b16 %v50
    %v196 = vunpack.c.h.b16 %v50
    %v197 = vunpack.c.l.b16 %v51
    %v198 = vunpack.c.h.b16 %v51
    %v199 = vpack.c.b16 %v191, %v191
    %v200 = vpack.c.b16 %v192, %v192
    %v201 = vpack.c.b16 %v193, %v193
    %v202 = vpack.c.b16 %v194, %v194
    %v203 = vpack.c.b16 %v195, %v195
    %v204 = vpack.c.b16 %v196, %v196
    %v205 = vpack.c.b16 %v197, %v197
    %v206 = vpack.c.b16 %v198, %v198
    %v343 = vunpack.c.l.b16 %v52
    %v344 = vunpack.c.l.b16 %v53
    %v345 = vunpack.c.l.b16 %v54
    %v346 = vunpack.c.l.b16 %v55
    %v347 = vunpack.c.l.b16 %v56
    %v348 = vunpack.c.l.b16 %v57
    %v349 = vunpack.c.l.b16 %v58
    %v350 = vunpack.c.l.b16 %v59
    %v351 = vunpack.c.l.b16 %v60
    %v352 = vunpack.c.l.b16 %v61
    %v353 = vunpack.c.l.b16 %v62
    %v354 = vunpack.c.l.b16 %v63
    %v355 = vunpack.c.l.b16 %v64
    %v356 = vunpack.c.l.b16 %v65
    %v357 = vunpack.c.l.b16 %v66
    %v358 = vunpack.c.l.b16 %v67
    %v359 = vunpack.c.l.b16 %v68
    %v360 = vunpack.c.l.b16 %v69
    %v361 = vunpack.c.l.b16 %v70
    %v362 = vunpack.c.l.b16 %v71
    %v363 = vunpack.c.l.b16 %v72
    %v364 = vunpack.c.l.b16 %v73
    %v365 = vunpack.c.l.b16 %v74
    %v366 = vunpack.c.l.b16 %v75
    %v367 = vunpack.c.l.b16 %v76
    %v368 = vunpack.c.l.b16 %v77
    %v369 = vunpack.c.l.b16 %v78
    %v370 = vunpack.c.l.b16 %v79
    %v371 = vunpack.c.l.b16 %v80
    %v372 = vunpack.c.l.b16 %v81
    %v373 = vunpack.c.l.b16 %v82
    %v374 = vunpack.c.l.b16 %v83
    %v375 = vunpack.c.l.b16 %v84
    %v376 = vunpack.c.l.b16 %v85
    %v377 = vunpack.c.l.b16 %v86
    %v378 = vunpack.c.l.b16 %v87
    %v379 = vunpack.c.l.b16 %v88
    %v380 = vunpack.c.l.b16 %v89
    %v381 = vunpack.c.l.b16 %v90
    %v382 = vunpack.c.l.b16 %v91
    %v383 = vunpack.c.l.b16 %v92
    %v384 = vunpack.c.l.b16 %v93
    %v385 = vunpack.c.l.b16 %v94
    %v386 = vunpack.c.l.b16 %v95
    %v387 = vunpack.c.l.b16 %v96
    %v388 = vunpack.c.l.b16 %v97
    %v389 = vunpack.c.l.b16 %v98
    %v390 = vunpack.c.l.b16 %v99
    %v391 = vunpack.c.l.b16 %v100
    %v392 = vunpack.c.l.b16 %v101
    %v393 = vunpack.c.l.b16 %v102
    %v394 = vunpack.c.l.b16 %v103
    %v395 = vunpack.c.l.b16 %v104
    %v396 = vunpack.c.l.b16 %v105
    %v397 = vunpack.c.l.b16 %v106
    %v398 = vunpack.c.l.b16 %v107
    %v399 = vunpack.c.l.b16 %v108
    %v400 = vunpack.c.l.b16 %v109
    %v401 = vunpack.c.l.b16 %v110
    %v402 = vunpack.c.l.b16 %v111
    %v403 = vunpack.c.l.b16 %v112
    %v404 = vunpack.c.l.b16 %v113
    %v405 = vunpack.c.l.b16 %v114
    %v406 = vunpack.c.l.b16 %v115
    %v407 = vunpack.c.l.b16 %v116
    %v408 = vunpack.c.l.b16 %v117
    %v409 = vunpack.c.l.b16 %v118
    %v410 = vunpack.c.l.b16 %v119
    %v411 = vunpack.c.l.b16 %v120
    %v412 = vunpack.c.l.b16 %v121
    %v413 = vunpack.c.l.b16 %v122
    %v414 = vunpack.c.l.b16 %v123
    %v415 = vunpack.c.l.b16 %v124
    %v416 = vunpack.c.l.b16 %v125
    %v417 = vunpack.c.l.b16 %v126
    %v418 = vunpack.c.l.b16 %v127
    %v419 = vunpack.c.l.b16 %v128
    %v420 = vunpack.c.l.b16 %v129
    %v421 = vunpack.c.l.b16 %v130
    %v422 = vunpack.c.l.b16 %v131
    %v423 = vunpack.c.l.b16 %v132
    %v424 = vunpack.c.l.b16 %v133
    %v425 = vunpack.c.l.b16 %v134
    %v426 = vunpack.c.l.b16 %v135
    %v427 = vunpack.c.l.b16 %v136
    %v428 = vunpack.c.l.b16 %v137
    %v429 = vunpack.c.l.b16 %v138
    %v430 = vunpack.c.l.b16 %v139
    %v431 = vunpack.c.l.b16 %v140
    %v432 = vunpack.c.l.b16 %v141
    %v433 = vunpack.c.l.b16 %v142
    %v434 = vunpack.c.l.b16 %v143
    %v435 = vunpack.c.l.b16 %v144
    %v436 = vunpack.c.l.b16 %v145
    %v437 = vunpack.c.l.b16 %v146
    %v438 = vunpack.c.l.b16 %v147
    %v439 = vunpack.c.l.b16 %v148
    %v440 = vunpack.c.l.b16 %v149
    %v441 = vunpack.c.l.b16 %v150
    %v442 = vunpack.c.l.b16 %v151
    %v443 = vunpack.c.l.b16 %v152
    %v444 = vunpack.c.l.b16 %v153
    %v445 = vunpack.c.l.b16 %v154
    %v446 = vunpack.c.l.b16 %v155
    %v447 = vunpack.c.l.b16 %v156
    %v448 = vunpack.c.l.b16 %v157
    %v449 = vunpack.c.l.b16 %v158
    %v450 = vunpack.c.l.b16 %v159
    %v451 = vunpack.c.l.b16 %v160
    %v452 = vunpack.c.l.b16 %v161
    %v453 = vunpack.c.l.b16 %v162
    %v454 = vunpack.c.l.b16 %v163
    %v455 = vunpack.c.l.b16 %v164
    %v456 = vunpack.c.l.b16 %v165
    %v457 = vunpack.c.l.b16 %v166
    %v458 = vunpack.c.l.b16 %v167
    %v459 = vunpack.c.l.b16 %v168
    %v460 = vunpack.c.l.b16 %v169
    %v461 = vunpack.c.l.b16 %v170
    %v462 = vunpack.c.l.b16 %v171
    %v463 = vunpack.c.l.b16 %v172
    %v464 = vunpack.c.l.b16 %v173
    %v465 = vunpack.c.l.b16 %v174
    %v466 = vunpack.c.l.b16 %v175
    %v467 = vunpack.c.l.b16 %v176
    %v468 = vunpack.c.l.b16 %v177
    %v469 = vunpack.c.l.b16 %v178
    %v470 = vunpack.c.l.b16 %v179
    %v471 = vpack.c.b16 %v344, %v343
    %v472 = vpack.c.b16 %v346, %v345
    %v473 = vpack.c.b16 %v348, %v347
    %v474 = vpack.c.b16 %v350, %v349
    %v475 = vpack.c.b16 %v352, %v351
    %v476 = vpack.c.b16 %v354, %v353
    %v477 = vpack.c.b16 %v356, %v355
    %v478 = vpack.c.b16 %v358, %v357
    %v479 = vpack.c.b16 %v360, %v359
    %v480 = vpack.c.b16 %v362, %v361
    %v481 = vpack.c.b16 %v364, %v363
    %v482 = vpack.c.b16 %v366, %v365
    %v483 = vpack.c.b16 %v368, %v367
    %v484 = vpack.c.b16 %v370, %v369
    %v485 = vpack.c.b16 %v372, %v371
    %v486 = vpack.c.b16 %v374, %v373
    %v487 = vpack.c.b16 %v376, %v375
    %v488 = vpack.c.b16 %v378, %v377
    %v489 = vpack.c.b16 %v380, %v379
    %v490 = vpack.c.b16 %v382, %v381
    %v491 = vpack.c.b16 %v384, %v383
    %v492 = vpack.c.b16 %v386, %v385
    %v493 = vpack.c.b16 %v388, %v387
    %v494 = vpack.c.b16 %v390, %v389
    %v495 = vpack.c.b16 %v392, %v391
    %v496 = vpack.c.b16 %v394, %v393
    %v497 = vpack.c.b16 %v396, %v395
    %v498 = vpack.c.b16 %v398, %v397
    %v499 = vpack.c.b16 %v400, %v399
    %v500 = vpack.c.b16 %v402, %v401
    %v501 = vpack.c.b16 %v404, %v403
    %v502 = vpack.c.b16 %v406, %v405
    %v503 = vpack.c.b16 %v408, %v407
    %v504 = vpack.c.b16 %v410, %v409
    %v505 = vpack.c.b16 %v412, %v411
    %v506 = vpack.c.b16 %v414, %v413
    %v507 = vpack.c.b16 %v416, %v415
    %v508 = vpack.c.b16 %v418, %v417
    %v509 = vpack.c.b16 %v420, %v419
    %v510 = vpack.c.b16 %v422, %v421
    %v511 = vpack.c.b16 %v424, %v423
    %v512 = vpack.c.b16 %v426, %v425
    %v513 = vpack.c.b16 %v428, %v427
    %v514 = vpack.c.b16 %v430, %v429
    %v515 = vpack.c.b16 %v432, %v431
    %v516 = vpack.c.b16 %v434, %v433
    %v517 = vpack.c.b16 %v436, %v435
    %v518 = vpack.c.b16 %v438, %v437
    %v519 = vpack.c.b16 %v440, %v439
    %v520 = vpack.c.b16 %v442, %v441
    %v521 = vpack.c.b16 %v444, %v443
    %v522 = vpack.c.b16 %v446, %v445
    %v523 = vpack.c.b16 %v448, %v447
    %v524 = vpack.c.b16 %v450, %v449
    %v525 = vpack.c.b16 %v452, %v451
    %v526 = vpack.c.b16 %v454, %v453
    %v527 = vpack.c.b16 %v456, %v455
    %v528 = vpack.c.b16 %v458, %v457
    %v529 = vpack.c.b16 %v460, %v459
    %v530 = vpack.c.b16 %v462, %v461
    %v531 = vpack.c.b16 %v464, %v463
    %v532 = vpack.c.b16 %v466, %v465
    %v533 = vpack.c.b16 %v468, %v467
    %v534 = vpack.c.b16 %v470, %v469
    %599 = vmatprep.subr.bf16.mxu0 0
    %600 = vmatpush1.bf16.msra.mxu0 %v471
    %601 = vmatprep.subr.bf16.mxu0 0
    %602 = vmatpush1.bf16.msra.mxu0 %v472
    %603 = vmatprep.subr.bf16.mxu0 0
    %604 = vmatpush1.bf16.msra.mxu0 %v473
    %605 = vmatprep.subr.bf16.mxu0 0
    %606 = vmatpush1.bf16.msra.mxu0 %v474
    %607 = vmatprep.subr.bf16.mxu0 0
    %608 = vmatpush1.bf16.msra.mxu0 %v475
    %609 = vmatprep.subr.bf16.mxu0 0
    %610 = vmatpush1.bf16.msra.mxu0 %v476
    %611 = vmatprep.subr.bf16.mxu0 0
    %612 = vmatpush1.bf16.msra.mxu0 %v477
    %613 = vmatprep.subr.bf16.mxu0 0
    %614 = vmatpush1.bf16.msra.mxu0 %v478
    %615 = vmatprep.subr.bf16.mxu0 0
    %616 = vmatpush1.bf16.msra.mxu0 %v479
    %617 = vmatprep.subr.bf16.mxu0 0
    %618 = vmatpush1.bf16.msra.mxu0 %v480
    %619 = vmatprep.subr.bf16.mxu0 0
    %620 = vmatpush1.bf16.msra.mxu0 %v481
    %621 = vmatprep.subr.bf16.mxu0 0
    %622 = vmatpush1.bf16.msra.mxu0 %v482
    %623 = vmatprep.subr.bf16.mxu0 0
    %624 = vmatpush1.bf16.msra.mxu0 %v483
    %625 = vmatprep.subr.bf16.mxu0 0
    %626 = vmatpush1.bf16.msra.mxu0 %v484
    %627 = vmatprep.subr.bf16.mxu0 0
    %628 = vmatpush1.bf16.msra.mxu0 %v485
    %629 = vmatprep.subr.bf16.mxu0 0
    %630 = vmatpush1.bf16.msra.mxu0 %v486
    %631 = vmatprep.mubr.bf16.mxu0 %v200
    %632 = vmatmul.mubr.bf16.gmra.mrb[0].mxu0 %v199
    %v633 = vpop.f32.mrb[0].mxu0
    %v634 = vadd.f32 %v185, %v633
    %v635 = vpop.f32.mrb[0].mxu0
    %v636 = vpop.f32.mrb[0].mxu0
    %v637 = vpop.f32.mrb[0].mxu0
    %638 = vdwg.mxu0
    %639 = vmatprep.subr.bf16.mxu0 0
    %640 = vmatpush1.bf16.msra.mxu0 %v487
    %641 = vmatprep.subr.bf16.mxu0 0
    %642 = vmatpush1.bf16.msra.mxu0 %v488
    %643 = vmatprep.subr.bf16.mxu0 0
    %644 = vmatpush1.bf16.msra.mxu0 %v489
    %645 = vmatprep.subr.bf16.mxu0 0
    %646 = vmatpush1.bf16.msra.mxu0 %v490
    %647 = vmatprep.subr.bf16.mxu0 0
    %648 = vmatpush1.bf16.msra.mxu0 %v491
    %649 = vmatprep.subr.bf16.mxu0 0
    %650 = vmatpush1.bf16.msra.mxu0 %v492
    %651 = vmatprep.subr.bf16.mxu0 0
    %652 = vmatpush1.bf16.msra.mxu0 %v493
    %653 = vmatprep.subr.bf16.mxu0 0
    %654 = vmatpush1.bf16.msra.mxu0 %v494
    %655 = vmatprep.subr.bf16.mxu0 0
    %656 = vmatpush1.bf16.msra.mxu0 %v495
    %657 = vmatprep.subr.bf16.mxu0 0
    %658 = vmatpush1.bf16.msra.mxu0 %v496
    %659 = vmatprep.subr.bf16.mxu0 0
    %660 = vmatpush1.bf16.msra.mxu0 %v497
    %661 = vmatprep.subr.bf16.mxu0 0
    %662 = vmatpush1.bf16.msra.mxu0 %v498
    %663 = vmatprep.subr.bf16.mxu0 0
    %664 = vmatpush1.bf16.msra.mxu0 %v499
    %665 = vmatprep.subr.bf16.mxu0 0
    %666 = vmatpush1.bf16.msra.mxu0 %v500
    %667 = vmatprep.subr.bf16.mxu0 0
    %668 = vmatpush1.bf16.msra.mxu0 %v501
    %669 = vmatprep.subr.bf16.mxu0 0
    %670 = vmatpush1.bf16.msra.mxu0 %v502
    %671 = vmatprep.mubr.bf16.mxu0 %v202
    %672 = vmatmul.mubr.bf16.gmra.mrb[0].mxu0 %v201
    %v673 = vpop.f32.mrb[0].mxu0
    %v674 = vadd.f32 %v634, %v673
    %v675 = vpop.f32.mrb[0].mxu0
    %v676 = vpop.f32.mrb[0].mxu0
    %v677 = vpop.f32.mrb[0].mxu0
    %678 = vdwg.mxu0
    %679 = vmatprep.subr.bf16.mxu0 0
    %680 = vmatpush1.bf16.msra.mxu0 %v503
    %681 = vmatprep.subr.bf16.mxu0 0
    %682 = vmatpush1.bf16.msra.mxu0 %v504
    %683 = vmatprep.subr.bf16.mxu0 0
    %684 = vmatpush1.bf16.msra.mxu0 %v505
    %685 = vmatprep.subr.bf16.mxu0 0
    %686 = vmatpush1.bf16.msra.mxu0 %v506
    %687 = vmatprep.subr.bf16.mxu0 0
    %688 = vmatpush1.bf16.msra.mxu0 %v507
    %689 = vmatprep.subr.bf16.mxu0 0
    %690 = vmatpush1.bf16.msra.mxu0 %v508
    %691 = vmatprep.subr.bf16.mxu0 0
    %692 = vmatpush1.bf16.msra.mxu0 %v509
    %693 = vmatprep.subr.bf16.mxu0 0
    %694 = vmatpush1.bf16.msra.mxu0 %v510
    %695 = vmatprep.subr.bf16.mxu0 0
    %696 = vmatpush1.bf16.msra.mxu0 %v511
    %697 = vmatprep.subr.bf16.mxu0 0
    %698 = vmatpush1.bf16.msra.mxu0 %v512
    %699 = vmatprep.subr.bf16.mxu0 0
    %700 = vmatpush1.bf16.msra.mxu0 %v513
    %701 = vmatprep.subr.bf16.mxu0 0
    %702 = vmatpush1.bf16.msra.mxu0 %v514
    %703 = vmatprep.subr.bf16.mxu0 0
    %704 = vmatpush1.bf16.msra.mxu0 %v515
    %705 = vmatprep.subr.bf16.mxu0 0
    %706 = vmatpush1.bf16.msra.mxu0 %v516
    %707 = vmatprep.subr.bf16.mxu0 0
    %708 = vmatpush1.bf16.msra.mxu0 %v517
    %709 = vmatprep.subr.bf16.mxu0 0
    %710 = vmatpush1.bf16.msra.mxu0 %v518
    %711 = vmatprep.mubr.bf16.mxu0 %v204
    %712 = vmatmul.mubr.bf16.gmra.mrb[0].mxu0 %v203
    %v713 = vpop.f32.mrb[0].mxu0
    %v714 = vadd.f32 %v674, %v713
    %v715 = vpop.f32.mrb[0].mxu0
    %v716 = vpop.f32.mrb[0].mxu0
    %v717 = vpop.f32.mrb[0].mxu0
    %718 = vdwg.mxu0
    %719 = vmatprep.subr.bf16.mxu0 0
    %720 = vmatpush1.bf16.msra.mxu0 %v519
    %721 = vmatprep.subr.bf16.mxu0 0
    %722 = vmatpush1.bf16.msra.mxu0 %v520
    %723 = vmatprep.subr.bf16.mxu0 0
    %724 = vmatpush1.bf16.msra.mxu0 %v521
    %725 = vmatprep.subr.bf16.mxu0 0
    %726 = vmatpush1.bf16.msra.mxu0 %v522
    %727 = vmatprep.subr.bf16.mxu0 0
    %728 = vmatpush1.bf16.msra.mxu0 %v523
    %729 = vmatprep.subr.bf16.mxu0 0
    %730 = vmatpush1.bf16.msra.mxu0 %v524
    %731 = vmatprep.subr.bf16.mxu0 0
    %732 = vmatpush1.bf16.msra.mxu0 %v525
    %733 = vmatprep.subr.bf16.mxu0 0
    %734 = vmatpush1.bf16.msra.mxu0 %v526
    %735 = vmatprep.subr.bf16.mxu0 0
    %736 = vmatpush1.bf16.msra.mxu0 %v527
    %737 = vmatprep.subr.bf16.mxu0 0
    %738 = vmatpush1.bf16.msra.mxu0 %v528
    %739 = vmatprep.subr.bf16.mxu0 0
    %740 = vmatpush1.bf16.msra.mxu0 %v529
    %741 = vmatprep.subr.bf16.mxu0 0
    %742 = vmatpush1.bf16.msra.mxu0 %v530
    %743 = vmatprep.subr.bf16.mxu0 0
    %744 = vmatpush1.bf16.msra.mxu0 %v531
    %745 = vmatprep.subr.bf16.mxu0 0
    %746 = vmatpush1.bf16.msra.mxu0 %v532
    %747 = vmatprep.subr.bf16.mxu0 0
    %748 = vmatpush1.bf16.msra.mxu0 %v533
    %749 = vmatprep.subr.bf16.mxu0 0
    %750 = vmatpush1.bf16.msra.mxu0 %v534
    %751 = vmatprep.mubr.bf16.mxu0 %v206
    %752 = vmatmul.mubr.bf16.gmra.mrb[0].mxu0 %v205
    %v753 = vpop.f32.mrb[0].mxu0
    %v754 = vadd.f32 %v714, %v753
    %v755 = vpop.f32.mrb[0].mxu0
    %v756 = vpop.f32.mrb[0].mxu0
    %v757 = vpop.f32.mrb[0].mxu0
    %758 = vdwg.mxu0
    %759 = vst [vmem:[#allocation7] sm:$0xff] %v754
    %v760 = vlaneseq
    %v761 = vand.u32 %v760, 127
    %vm762 = vcmp.lt.s32.totalorder %v761, 10
    %v763 = vsel %vm762, %v754, -1e+30
    %764 = vmax.xlane.f32.xlu0 %v763
    %v765 = vpop.xlane.xlu0 %764
    %v766 = vsub.f32 %v763, %v765
    %v767 = vmul.f32 %v766, 1.442695
    %v768 = vpow.pop %v767
    %769 = vadd.xlane.f32.xlu0 %v768
    %v770 = vpop.xlane.xlu0 %769
    %v771 = vlog2.pop %v770
    %v772 = vmul.f32 %v771, 0.6931472
    %v773 = vadd.f32 %v765, %v772
    %v774 = vld [vmem:[%s3] sm:$0xff]
    %775 = vset.pattern.permute.xlu0 0
    %776 = vperm.xlu0 %775, %v774
    %v777 = vpop.permute.xlu0 %776
    %vm778 = vcmp.eq.s32.totalorder %v761, %v777
    %v779 = vsel %vm778, %v754, 0.0
    %780 = vadd.xlane.f32.xlu0 %v779
    %v781 = vpop.xlane.xlu0 %780
    %vm782 = vcmp.ge.s32.totalorder %v774, 0
    %v783 = vsub.f32 %v773, %v781
    %v784 = vsel %vm782, %v783, 0.0
    %vm785 = vcmask 7168
    %v786 = vsel %vm785, %v784, 0.0
    %787 = vadd.xlane.f32.xlu0 %v786
    %v788 = vpop.xlane.xlu0 %787
    %v789 = vrot.slane %v788, 4
    %v790 = vadd.f32 %v788, %v789
    %v791 = vrot.slane %v790, 2
    %v792 = vadd.f32 %v790, %v791
    %v793 = vrot.slane %v792, 1
    %v794 = vadd.f32 %v792, %v793
    %s795 = vtos %v794
    %v796 = vstv %s795
    %797 = vst [vmem:[#allocation8] sm:$0x1] %v796
    // Predicated region
    $region26: #{tpu_custom_call.1} parent=1 // pred_check
      _
    $region27: #{tpu_custom_call.1} parent=1 // pred_check_branch
      %799 = sbr.rel (0) target = $region29
    $region28: #{tpu_custom_call.1} parent=1 // pred_region
      %s801 = ssub.s32 128, 128
      %802 = vsyncadd [#allocation4], %s801
      %s804 = sshll.u32 [#allocation7], 4
      %s805 = int_to_ptr.vmem [resolvable:$true] %s804
      %807 = dma.vmem_to_hbm [thread:$0]  %s805, 128, %s4, [#allocation4]
    $region29: #{tpu_custom_call.1} parent=1 // pred_fallthru
      _
    // Predicated region
    $region30: #{tpu_custom_call.1} parent=1 // pred_check
      _
    $region31: #{tpu_custom_call.1} parent=1 // pred_check_branch
      %809 = sbr.rel (0) target = $region33
    $region32: #{tpu_custom_call.1} parent=1 // pred_region
      %s811 = ssub.s32 16, 16
      %812 = vsyncadd [#allocation9], %s811
      %s814 = sshll.u32 [#allocation8], 4
      %s815 = int_to_ptr.vmem [resolvable:$true] %s814
      %817 = dma.vmem_to_hbm [thread:$0]  %s815, 16, %s5, [#allocation9]
    $region33: #{tpu_custom_call.1} parent=1 // pred_fallthru
      _
    // Predicated region
    $region34: #{tpu_custom_call.1} parent=1 // pred_check
      _
    $region35: #{tpu_custom_call.1} parent=1 // pred_check_branch
      %819 = sbr.rel (0) target = $region37
    $region36: #{tpu_custom_call.1} parent=1 // pred_region
      %820 = dma.done [#allocation4], 128
    $region37: #{tpu_custom_call.1} parent=1 // pred_fallthru
      _
    // Predicated region
    $region38: #{tpu_custom_call.1} parent=1 // pred_check
      _
    $region39: #{tpu_custom_call.1} parent=1 // pred_check_branch
      %822 = sbr.rel (0) target = $region41
    $region40: #{tpu_custom_call.1} parent=1 // pred_region
      %823 = dma.done [#allocation9], 16
    $region41: #{tpu_custom_call.1} parent=1 // pred_fallthru
      _
    %824 = vsyncpa [#allocation3], 1
    %825 = vsyncpa [#allocation6], 1
    %826 = vsyncpa [#allocation4], 1
    %827 = vsyncpa [#allocation9], 1

</llo_original>
